<compile_context>
chip_gen: v7x
topology: tpu7x:2x2x1
jax: 0.10.0
libtpu: 0.0.40
codegen_flags: <defaults>
</compile_context>

<pallas_src>
import functools

import jax
import jax.numpy as jnp
import numpy as np
from jax.experimental import pallas as pl
from jax.experimental.pallas import tpu as pltpu


# ----------------------------- helpers ------------------------------------ #

def _round_up(x, m):
    return ((x + m - 1) // m) * m


def _pad2(x, rows, cols):
    return jnp.pad(x, ((0, rows - x.shape[0]), (0, cols - x.shape[1])))


def _pad_gated(w, H, Hp):
    """(.., 3H) -> (.., 3Hp): each gate block zero-padded to Hp lanes."""
    parts = [w[..., g * H:(g + 1) * H] for g in range(3)]
    parts = [jnp.pad(p, [(0, 0)] * (p.ndim - 1) + [(0, Hp - H)]) for p in parts]
    return jnp.concatenate(parts, axis=-1)


# ------------------- generic tiled matmul (hoisted GEMMs) ------------------ #

def _matmul_kernel(a_ref, b_ref, o_ref):
    o_ref[...] = jnp.dot(a_ref[...], b_ref[...],
                         preferred_element_type=jnp.float32)


def _matmul(a, b, *, tm=128, tn=256):
    """(M, K) @ (K, N) -> (M, N) in f32.  K kept whole (padded, lane-aligned)."""
    M, K = a.shape
    _, N = b.shape
    tm = min(tm, M)                      # M is a multiple of 8 (padded batch)
    tn = min(tn, N)                      # N is a multiple of 128 (padded lanes)
    while N % tn and tn > 128:           # prefer a tile that divides N exactly
        tn -= 128
    grid = (pl.cdiv(M, tm), pl.cdiv(N, tn))
    return pl.pallas_call(
        _matmul_kernel,
        out_shape=jax.ShapeDtypeStruct((M, N), jnp.float32),
        grid=grid,
        in_specs=[pl.BlockSpec((tm, K), lambda i, j: (i, 0)),
                  pl.BlockSpec((K, tn), lambda i, j: (0, j))],
        out_specs=pl.BlockSpec((tm, tn), lambda i, j: (i, j)),
        compiler_params=pltpu.CompilerParams(
            dimension_semantics=("parallel", "parallel")),
    )(a, b)


# --------------------- kernel: full decode recurrence ---------------------- #

def _decode_loop_kernel(
    # inputs (all fully resident in VMEM, loaded once)
    gi_emb_ref,     # (T, Bp, 3Hp)  precomputed emb->gates (+ b_ih), per step
    src_mem_ref,    # (Bp, S, Hp)
    bias_ref,       # (Bp, S)       additive mask bias (0 valid / -1e9 pad)
    init_h_ref,     # (Bp, Hp)
    init_out_ref,   # (Bp, Ep)
    w_ih_o_ref,     # (Ep, 3Hp)     GRU input->gates, prev-output half
    w_hh_ref,       # (Hp, 3Hp)
    b_hh_ref,       # (1, 3Hp)
    wq1_ref,        # (Hp, 2Hp)     fused [query proj | out-proj L1 hidden half]
    bq1_ref,        # (1, 2Hp)      fused [bq | b1]
    w1c_ref,        # (Hp, Hp)      output projection L1, context half
    w2_ref,         # (Hp, Ep)      output projection L2
    b2_ref,         # (1, Ep)
    # output
    out_ref,        # (T, Bp, Ep)   decoder "output" per step (pre-logits)
    *, hidden_pad, seq_len, unroll,
):
    Hp = hidden_pad

    # Hoist all constant loads out of the decode loop.
    mem = src_mem_ref[...]
    bias = bias_ref[...]
    w_ih_o = w_ih_o_ref[...]
    w_hh = w_hh_ref[...]
    b_hh = b_hh_ref[...]
    wq1 = wq1_ref[...]
    bq1 = bq1_ref[...]
    w1c = w1c_ref[...]
    w2 = w2_ref[...]
    b2 = b2_ref[...]

    def step(i, carry):
        h, prev_out = carry

        # --- GRU cell (concat-free; embedding half precomputed; gates r|z|n)
        gi = gi_emb_ref[i] + jnp.dot(prev_out, w_ih_o,
                                     preferred_element_type=jnp.float32)
        gh = jnp.dot(h, w_hh, preferred_element_type=jnp.float32) + b_hh
        r = jax.nn.sigmoid(gi[:, :Hp] + gh[:, :Hp])
        z = jax.nn.sigmoid(gi[:, Hp:2 * Hp] + gh[:, Hp:2 * Hp])
        n = jnp.tanh(gi[:, 2 * Hp:] + r * gh[:, 2 * Hp:])
        h_new = (1.0 - z) * n + z * h                          # (Bp, Hp)

        # --- fused query proj + out-proj-L1 hidden half (single MXU call) --
        qh = jnp.dot(h_new, wq1, preferred_element_type=jnp.float32) + bq1
        q = qh[:, :Hp]                                         # (Bp, Hp)

        # --- masked dot-product attention (MXU) ----------------------------
        s = jnp.einsum('bqh,bsh->bqs', q[:, None, :], mem,
                       preferred_element_type=jnp.float32)[:, 0, :]   # (Bp, S)
        s = s + bias                                           # additive mask
        s = s - jnp.max(s, axis=1, keepdims=True)
        ew = jnp.exp(s)
        attn = ew * pl.reciprocal(jnp.sum(ew, axis=1, keepdims=True),
                                  approx=True)                 # (Bp, S)
        ctx = jnp.einsum('bqs,bsh->bqh', attn[:, None, :], mem,
                         preferred_element_type=jnp.float32)[:, 0, :]  # (Bp, Hp)

        # --- output projection: Linear(2H->H) -> Tanh -> Linear(H->E) ------
        hid = jnp.tanh(qh[:, Hp:] +
                       jnp.dot(ctx, w1c, preferred_element_type=jnp.float32))
        out = jnp.dot(hid, w2, preferred_element_type=jnp.float32) + b2

        out_ref[i] = out                                       # (Bp, Ep) slab
        return (h_new, out)

    jax.lax.fori_loop(0, seq_len, step,
                      (init_h_ref[...], init_out_ref[...]),
                      unroll=unroll)


# ------------------------------ wrapper ----------------------------------- #

def decoder_forward(params, src_memory, src_mask, init_states, init_output, trg):
    """Pallas equivalent of Decoder.forward. Returns logits (B, T, V)."""
    B, T = trg.shape
    V, E = params["emb"].shape
    S = src_memory.shape[1]
    H = init_states.shape[-1]

    # Padded (vreg/MXU aligned) sizes.
    Hp = _round_up(H, 128)
    Ep = _round_up(E, 128)
    Vp = _round_up(V, 128)
    Bp = _round_up(max(B, 8), 8)

    f32 = jnp.float32

    # ---- weight prep: split concats, split gates, zero-pad to aligned dims.
    w_ih = params["w_ih"]                                     # (2E, 3H)
    w_ih_e = jnp.pad(_pad_gated(w_ih[:E], H, Hp), ((0, Ep - E), (0, 0)))
    w_ih_o = jnp.pad(_pad_gated(w_ih[E:], H, Hp), ((0, Ep - E), (0, 0)))
    b_ih_p = _pad_gated(params["b_ih"], H, Hp)                # (1, 3Hp)
    w_hh_p = jnp.pad(_pad_gated(params["w_hh"], H, Hp), ((0, Hp - H), (0, 0)))
    b_hh_p = _pad_gated(params["b_hh"], H, Hp)
    wq_p = _pad2(params["wq"], Hp, Hp)
    bq_p = _pad2(params["bq"], 1, Hp)
    w1h_p = _pad2(params["w1"][:H], Hp, Hp)
    w1c_p = _pad2(params["w1"][H:], Hp, Hp)
    b1_p = _pad2(params["b1"], 1, Hp)
    w2_p = _pad2(params["w2"], Hp, Ep)
    b2_p = _pad2(params["b2"], 1, Ep)
    emb_p = _pad2(params["emb"], V, Ep)                       # (V, Ep)
    emb_wt_p = _pad2(params["emb"].T, Ep, Vp)                 # (Ep, Vp)

    # Fused per-step projections that consume the fresh hidden state.
    wq1_p = jnp.concatenate([wq_p, w1h_p], axis=1)            # (Hp, 2Hp)
    bq1_p = jnp.concatenate([bq_p, b1_p], axis=1)             # (1, 2Hp)

    # ---- activation prep (cheap XLA glue).
    trg_emb = emb_p[trg.T]                                    # (T, B, Ep) gather
    trg_emb = jnp.pad(trg_emb, ((0, 0), (0, Bp - B), (0, 0)))  # (T, Bp, Ep)
    src_mem_p = jnp.pad(src_memory, ((0, Bp - B), (0, 0), (0, Hp - H)))
    mask_p = jnp.pad(src_mask, ((0, Bp - B), (0, 0)))
    bias_p = jnp.where(mask_p > 0.5, 0.0, -1e9).astype(f32)   # additive mask
    init_h_p = _pad2(init_states[-1], Bp, Hp)
    init_out_p = _pad2(init_output, Bp, Ep)

    # Hoisted, non-recurrent GEMM: embeddings -> GRU input gates for ALL steps
    # in one tiled Pallas matmul (keeps the recurrent kernel on the true
    # sequential critical path only).
    gi_flat = _matmul(trg_emb.reshape(T * Bp, Ep), w_ih_e)    # (T*Bp, 3Hp)
    gi_emb = (gi_flat + b_ih_p).reshape(T, Bp, 3 * Hp)        # (T, Bp, 3Hp)

    operands = (gi_emb, src_mem_p, bias_p, init_h_p, init_out_p,
                w_ih_o, w_hh_p, b_hh_p, wq1_p, bq1_p, w1c_p, w2_p, b2_p)

    # Explicit VMEM budget: everything is resident exactly once (grid=(1,)).
    op_bytes = sum(int(x.size) * x.dtype.itemsize for x in operands)
    op_bytes += T * Bp * Ep * 4
    vmem_limit = int(min(max(2 * op_bytes + (2 << 20), 8 << 20), 32 << 20))

    def full_spec(shape):
        n = len(shape)
        return pl.BlockSpec(shape, lambda *_: (0,) * n)

    kernel = functools.partial(_decode_loop_kernel,
                               hidden_pad=Hp, seq_len=T,
                               unroll=bool(T <= 16))

    # Decode recurrence: one grid point, fori_loop over T inside the kernel.
    outs = pl.pallas_call(
        kernel,
        out_shape=jax.ShapeDtypeStruct((T, Bp, Ep), f32),
        grid=(1,),
        in_specs=[full_spec(x.shape) for x in operands],
        out_specs=full_spec((T, Bp, Ep)),
        compiler_params=pltpu.CompilerParams(
            dimension_semantics=("arbitrary",),
            vmem_limit_bytes=vmem_limit,
        ),
    )(*operands)

    # Hoisted vocab GEMM. Re-order the SMALL (T,Bp,Ep) tensor to batch-major
    # rows so the big (B,T,V) logits come out in the right layout directly
    # (no transpose of the logits tensor).
    outs_bm = jnp.transpose(outs, (1, 0, 2)).reshape(Bp * T, Ep)
    logits_flat = _matmul(outs_bm, emb_wt_p)                  # (Bp*T, Vp)
    logits = logits_flat.reshape(Bp, T, Vp)[:B, :, :V]        # (B, T, V)
    return logits


# --------------------------- pure-JAX reference ---------------------------- #

def decoder_forward_ref(params, src_memory, src_mask, init_states, init_output, trg):
    B, T = trg.shape
    H = init_states.shape[-1]
    h = init_states[-1]
    out = init_output
    logits = []
    for i in range(T):
        emb = params["emb"][trg[:, i]]
        x = jnp.concatenate([emb, out], axis=1)
        gi = x @ params["w_ih"] + params["b_ih"]
        gh = h @ params["w_hh"] + params["b_hh"]
        r = jax.nn.sigmoid(gi[:, :H] + gh[:, :H])
        z = jax.nn.sigmoid(gi[:, H:2 * H] + gh[:, H:2 * H])
        n = jnp.tanh(gi[:, 2 * H:] + r * gh[:, 2 * H:])
        h = (1.0 - z) * n + z * h
        q = h @ params["wq"] + params["bq"]
        scores = jnp.einsum("bsh,bh->bs", src_memory, q)
        scores = jnp.where(src_mask > 0.5, scores, -1e9)
        attn = jax.nn.softmax(scores, axis=1)
        ctx = jnp.einsum("bs,bsh->bh", attn, src_memory)
        hid = jnp.tanh(jnp.concatenate([h, ctx], axis=1) @ params["w1"] + params["b1"])
        out = hid @ params["w2"] + params["b2"]
        logits.append(out @ params["emb"].T)
    return jnp.stack(logits, axis=1)


# --------------------------------- main ------------------------------------ #

if __name__ == "__main__":
    B, T, S = 2, 8, 8           # batch, trg length, src length
    H, E, V = 32, 16, 64        # hidden_size, embedding_dim, vocab_size

    key = jax.random.PRNGKey(0)
    ks = jax.random.split(key, 16)

    def init(k, shape, scale=0.1):
        return (scale * jax.random.normal(k, shape)).astype(jnp.float32)

    params = {
        "emb":  init(ks[0], (V, E)),
        "w_ih": init(ks[1], (2 * E, 3 * H)),
        "b_ih": init(ks[2], (1, 3 * H)),
        "w_hh": init(ks[3], (H, 3 * H)),
        "b_hh": init(ks[4], (1, 3 * H)),
        "wq":   init(ks[5], (H, H)),
        "bq":   init(ks[6], (1, H)),
        "w1":   init(ks[7], (2 * H, H)),
        "b1":   init(ks[8], (1, H)),
        "w2":   init(ks[9], (H, E)),
        "b2":   init(ks[10], (1, E)),
    }

    src_memory = init(ks[11], (B, S, H), scale=1.0)
    # mask out the tail of the second sequence
    src_mask = jnp.stack(
        [jnp.ones((S,), jnp.float32),
         (jnp.arange(S) < 5).astype(jnp.float32)], axis=0)            # (B, S)
    init_states = init(ks[12], (1, B, H), scale=1.0)                  # (layers, B, H)
    init_output = init(ks[13], (B, E), scale=1.0)
    trg = jax.random.randint(ks[14], (B, T), 0, V, dtype=jnp.int32)

    logits = decoder_forward(params, src_memory, src_mask, init_states,
                             init_output, trg)
    logits = jax.block_until_ready(logits)

    ref = decoder_forward_ref(params, src_memory, src_mask, init_states,
                              init_output, trg)
    # slightly loose tolerance: softmax uses pl.reciprocal(approx=True)
    np.testing.assert_allclose(np.asarray(logits), np.asarray(ref),
                               rtol=2e-3, atol=2e-3)

    assert logits.shape == (B, T, V)
    print("KERNEL_OK")
</pallas_src>

<mosaic_0001>
module attributes {stable_mosaic.version = 11 : i64} {
  func.func @_matmul_kernel(%arg0: i32, %arg1: i32, %arg2: memref<64x128xf32, #tpu.memory_space<vmem>>, %arg3: memref<128x128xf32, #tpu.memory_space<vmem>>, %arg4: memref<64x128xf32, #tpu.memory_space<vmem>>) attributes {dimension_semantics = [#tpu.dimension_semantics<parallel>, #tpu.dimension_semantics<parallel>], iteration_bounds = array<i64: 1, 3>, scalar_prefetch = 0 : i64, scratch_operands = 0 : i64, tpu.core_type = #tpu.core_type<tc>, window_params = [{transform_indices = @transform_0, window_bounds = array<i64: 64, 128>}, {transform_indices = @transform_1, window_bounds = array<i64: 128, 128>}, {transform_indices = @transform_2, window_bounds = array<i64: 64, 128>}]} {
    %c0 = arith.constant 0 : index
    %c0_0 = arith.constant 0 : index
    %0 = vector.load %arg2[%c0, %c0_0] : memref<64x128xf32, #tpu.memory_space<vmem>>, vector<64x128xf32>
    %c0_1 = arith.constant 0 : index
    %c0_2 = arith.constant 0 : index
    %1 = vector.load %arg3[%c0_1, %c0_2] : memref<128x128xf32, #tpu.memory_space<vmem>>, vector<128x128xf32>
    %cst = arith.constant dense<0.000000e+00> : vector<64x128xf32>
    %2 = tpu.matmul %0, %1, %cst {dimension_numbers = #tpu.dot_dimension_numbers<[1], [0], [0], [1], [0, 0, 1, 1], [], []>} : vector<64x128xf32>, vector<128x128xf32>, vector<64x128xf32> -> vector<64x128xf32>
    %c0_3 = arith.constant 0 : index
    %c0_4 = arith.constant 0 : index
    %3 = vector.load %arg4[%c0_3, %c0_4] : memref<64x128xf32, #tpu.memory_space<vmem>>, vector<64x128xf32>
    tpu.vector_store %arg4[%c0_3, %c0_4], %2 {strides = array<i32>} : memref<64x128xf32, #tpu.memory_space<vmem>>, vector<64x128xf32>,
    return
  }
  func.func @transform_0(%arg0: i32, %arg1: i32) -> (i32, i32) {
    %c0_i32 = arith.constant 0 : i32
    %c0_i32_0 = arith.constant 0 : i32
    return %arg0, %c0_i32 : i32, i32
  }
  func.func @transform_1(%arg0: i32, %arg1: i32) -> (i32, i32) {
    %c0_i32 = arith.constant 0 : i32
    %c0_i32_0 = arith.constant 0 : i32
    return %c0_i32, %arg1 : i32, i32
  }
  func.func @transform_2(%arg0: i32, %arg1: i32) -> (i32, i32) {
    %c0_i32 = arith.constant 0 : i32
    return %arg0, %arg1 : i32, i32
  }
}

</mosaic_0001>

<llo_original>
// kernel: tpu_custom_call.1
$region0: #{tpu_custom_call.1}
  #allocation0 [shape = 'u32[]', space=smem, size = 0x4, offset = 0x4, fixed_abs, tag = 'smem constant byte address 0x4 - core index']
  #allocation1 [shape = 'u32[144,128]{1,0:T(1,128)}', space=vmem, size = 0x12000, scoped, tag = 'internal scratch']
  %s0 = inlined_call_operand.hbm [shape: f32[64,128], index: 0, kind: input, shape index: {}]
  %s1 = inlined_call_operand.hbm [shape: f32[128,384], index: 1, kind: input, shape index: {}]
  %s2 = inlined_call_operand.hbm [shape: f32[64,384], index: 2, kind: output, shape index: {}]
  %s3 = sld [smem:[#allocation0]]
  $region49: #{tpu_custom_call.1} parent=0
    _
  %s5 = ssub.s32 1, %s3
  %s6 = scalar_select 0, %s5, %s3
  $region1: #{tpu_custom_call.1} parent=0
    #allocation2 [shape = 'u8[32768]{0}', space=vmem, size = 0x8000, scoped, tag = 'input window, operand 0, single buffered']
    #allocation3 [shape = 's32[2]{0}', space=sflag, size = 0x8, scoped, tag = 'scoped memory for tpu_custom_call.1']
    #allocation4 [shape = 's32[2]{0}', space=sflag, size = 0x8, scoped, tag = 'scoped memory for tpu_custom_call.1']
    #allocation5 [shape = 'u8[131072]{0}', space=vmem, size = 0x20000, scoped, tag = 'input window, operand 1']
    #allocation6 [shape = 's32[2]{0}', space=sflag, size = 0x8, scoped, tag = 'scoped memory for tpu_custom_call.1']
    #allocation7 [shape = 'u8[65536]{0}', space=vmem, size = 0x10000, scoped, tag = 'output window, operand 0']
    %7 = vsyncpa [#allocation3], 0
    %8 = vsyncpa [#allocation6], 0
    %s9 = scalar_lea.sflag [#allocation6], 1
    %10 = vsyncpa %s9, 0
    %11 = vsyncpa [#allocation4], 0
    %s12 = scalar_lea.sflag [#allocation4], 1
    %13 = vsyncpa %s12, 0
    loop: start=0, step=1, limit=5
    $region2: #{tpu_custom_call.1} parent=1 // loop_pre_header
      _
    $region3: #{tpu_custom_call.1} parent=1 // loop_header
      %s15 = sphi 0, %s19
      %p16 = scmp.ge.s32.totalorder %s15, 5
      %s22 = sphi 0, %s34
      %s23 = sphi 0, %s30
      %s24 = sphi 0, %s22
      %s25 = sphi 0, %s23
      %s26 = sphi 0, %s24
      %s27 = sphi 0, %s25
      %s37 = sphi 0, %s39
      %s40 = sphi 0, %s37
      %s41 = sphi 0, %s40
      %s57 = sphi 0, %s41
      %s63 = sphi 0, %s65
      %s66 = sphi 0, %s63
      %s67 = sphi 0, %s66
      %s83 = sphi 0, %s67
      %s91 = sphi 0, %s93
      %s94 = sphi 0, %s91
      %s95 = sphi 0, %s94
      %s111 = sphi 0, %s95
    $region4: #{tpu_custom_call.1} parent=1 // loop_header_branch
      %18 = sbr.rel (%p16) target = $region8
    $region5: #{tpu_custom_call.1} parent=1 // loop_body
      %s20 = ssub.s32 %s15, 1
      %s21 = ssub.s32 %s15, 2
      %s28 = sadd.s32 1, %s23
      %p29 = scmp.ge.s32.totalorder %s28, 3
      %s30 = scalar_select %p29, 0, %s28
      %s31 = sadd.s32 1, %s22
      %s32 = scalar_select %p29, %s31, %s22
      %p33 = scmp.ge.s32.totalorder %s32, 1
      %s34 = scalar_select %p33, 0, %s32
      %s35 = ssub.s32 %s22, %s34
      %p36 = scmp.eq.s32.totalorder %s35, 0
      %s38 = sadd.s32 %s37, 1
      %s39 = scalar_select %p36, %s37, %s38
      %p42 = pneg %p36
      %p43 = scmp.eq.s32.totalorder %s15, 2
      %p44 = por %p42, %p43
      %p45 = scmp.ne.s32.totalorder %s37, %s40
      %p46 = scmp.eq.s32.totalorder %s15, 0
      %p47 = por %p45, %p46
      %p48 = scmp.ne.s32.totalorder %s37, %s40
      %p49 = scmp.eq.s32.totalorder %s20, 2
      %p50 = por %p48, %p49
      %p51 = scmp.ne.s32.totalorder %s40, %s41
      %p52 = scmp.eq.s32.totalorder %s20, 0
      %p53 = por %p51, %p52
      %p54 = scmp.ne.s32.totalorder %s40, %s41
      %p55 = scmp.eq.s32.totalorder %s21, 2
      %p56 = por %p54, %p55
      %p58 = scmp.ne.s32.totalorder %s41, %s57
      %p59 = scmp.eq.s32.totalorder %s21, 0
      %p60 = por %p58, %p59
      %s61 = ssub.s32 %s23, %s30
      %p62 = scmp.eq.s32.totalorder %s61, 0
      %s64 = sadd.s32 %s63, 1
      %s65 = scalar_select %p62, %s63, %s64
      %p68 = pneg %p62
      %p69 = scmp.eq.s32.totalorder %s15, 2
      %p70 = por %p68, %p69
      %p71 = scmp.ne.s32.totalorder %s63, %s66
      %p72 = scmp.eq.s32.totalorder %s15, 0
      %p73 = por %p71, %p72
      %p74 = scmp.ne.s32.totalorder %s63, %s66
      %p75 = scmp.eq.s32.totalorder %s20, 2
      %p76 = por %p74, %p75
      %p77 = scmp.ne.s32.totalorder %s66, %s67
      %p78 = scmp.eq.s32.totalorder %s20, 0
      %p79 = por %p77, %p78
      %p80 = scmp.ne.s32.totalorder %s66, %s67
      %p81 = scmp.eq.s32.totalorder %s21, 2
      %p82 = por %p80, %p81
      %p84 = scmp.ne.s32.totalorder %s67, %s83
      %p85 = scmp.eq.s32.totalorder %s21, 0
      %p86 = por %p84, %p85
      %s87 = ssub.s32 %s22, %s34
      %s88 = ssub.s32 %s23, %s30
      %s89 = sor.u32 %s87, %s88
      %p90 = scmp.eq.s32.totalorder %s89, 0
      %s92 = sadd.s32 %s91, 1
      %s93 = scalar_select %p90, %s91, %s92
      %p96 = pneg %p90
      %p97 = scmp.eq.s32.totalorder %s15, 2
      %p98 = por %p96, %p97
      %p99 = scmp.ne.s32.totalorder %s91, %s94
      %p100 = scmp.eq.s32.totalorder %s15, 0
      %p101 = por %p99, %p100
      %p102 = scmp.ne.s32.totalorder %s91, %s94
      %p103 = scmp.eq.s32.totalorder %s20, 2
      %p104 = por %p102, %p103
      %p105 = scmp.ne.s32.totalorder %s94, %s95
      %p106 = scmp.eq.s32.totalorder %s20, 0
      %p107 = por %p105, %p106
      %p108 = scmp.ne.s32.totalorder %s94, %s95
      %p109 = scmp.eq.s32.totalorder %s21, 2
      %p110 = por %p108, %p109
      %p112 = scmp.ne.s32.totalorder %s95, %s111
      %p113 = scmp.eq.s32.totalorder %s21, 0
      %p114 = por %p112, %p113
      %p115 = scmp.le.s32.totalorder 1, %s15
      %p116 = scmp.lt.s32.totalorder %s15, 4
      %p117 = pnand %p115, %p116
      %p118 = pneg %p117
      // Predicated region
      $region9: #{tpu_custom_call.1} parent=5 // pred_check
        _
      $region10: #{tpu_custom_call.1} parent=5 // pred_check_branch
        %120 = sbr.rel (%p117) target = $region12
      $region11: #{tpu_custom_call.1} parent=5 // pred_region
        %s121 = ssub.s32 %s15, 1
        // Predicated region
        $region13: #{tpu_custom_call.1} parent=11 // pred_check
          %p122 = pneg %p53
        $region14: #{tpu_custom_call.1} parent=11 // pred_check_branch
          %124 = sbr.rel (%p122) target = $region16
        $region15: #{tpu_custom_call.1} parent=11 // pred_region
          %s125 = smul.u32 8, %s24
          %s127 = ssub.s32 1024, 1024
          %128 = vsyncadd [#allocation3], %s127
          %s129 = smul.addr %s125, 128
          %s130 = scalar_lea.hbm %s0, %s129
          %s131 = sshll.u32 [#allocation2], 4
          %s132 = int_to_ptr.vmem [resolvable:$true] %s131
          %137 = dma.hbm_to_vmem [thread:$0]  %s130, 1024, %s132, [#allocation3], 128, 128, 8
        $region16: #{tpu_custom_call.1} parent=11 // pred_fallthru
          _
      $region12: #{tpu_custom_call.1} parent=5 // pred_fallthru
        _
      %p138 = scmp.lt.s32.totalorder %s15, 3
      // Predicated region
      $region17: #{tpu_custom_call.1} parent=5 // pred_check
        %p139 = pneg %p138
      $region18: #{tpu_custom_call.1} parent=5 // pred_check_branch
        %141 = sbr.rel (%p139) target = $region20
      $region19: #{tpu_custom_call.1} parent=5 // pred_region
        // Predicated region
        $region21: #{tpu_custom_call.1} parent=19 // pred_check
          %p142 = pneg %p73
        $region22: #{tpu_custom_call.1} parent=19 // pred_check_branch
          %144 = sbr.rel (%p142) target = $region24
        $region23: #{tpu_custom_call.1} parent=19 // pred_region
          %s145 = sand.u32 %s63, 1
          %s146 = scalar_lea.sflag [#allocation6], %s145
          %s147 = sand.u32 %s63, 1
          %s148 = smul.addr %s147, 128
          %s149 = scalar_lea.vmem [#allocation5], %s148
          %s151 = ssub.s32 2048, 2048
          %152 = vsyncadd %s146, %s151
          %s153 = smul.addr %s23, 128
          %s154 = scalar_lea.hbm %s1, %s153
          %s155 = sshll.u32 %s149, 4
          %s156 = int_to_ptr.vmem [resolvable:$true] %s155
          %161 = dma.hbm_to_vmem [thread:$0]  %s154, 2048, %s156, %s146, 384, 128, 8
        $region24: #{tpu_custom_call.1} parent=19 // pred_fallthru
          _
      $region20: #{tpu_custom_call.1} parent=5 // pred_fallthru
        _
      %p162 = scmp.le.s32.totalorder 1, %s15
      %p163 = scmp.lt.s32.totalorder %s15, 4
      %p164 = pnand %p162, %p163
      %p165 = pneg %p164
      // Predicated region
      $region25: #{tpu_custom_call.1} parent=5 // pred_check
        _
      $region26: #{tpu_custom_call.1} parent=5 // pred_check_branch
        %167 = sbr.rel (%p164) target = $region28
      $region27: #{tpu_custom_call.1} parent=5 // pred_region
        %s168 = ssub.s32 %s15, 1
        // Predicated region
        $region29: #{tpu_custom_call.1} parent=27 // pred_check
          %p169 = pneg %p53
        $region30: #{tpu_custom_call.1} parent=27 // pred_check_branch
          %171 = sbr.rel (%p169) target = $region32
        $region31: #{tpu_custom_call.1} parent=27 // pred_region
          %172 = dma.done [#allocation3], 1024
        $region32: #{tpu_custom_call.1} parent=27 // pred_fallthru
          _
        %s173 = sand.u32 %s66, 1
        %s174 = scalar_lea.sflag [#allocation6], %s173
        %s175 = sand.u32 %s66, 1
        %s176 = smul.addr %s175, 128
        %s177 = scalar_lea.vmem [#allocation5], %s176
        // Predicated region
        $region33: #{tpu_custom_call.1} parent=27 // pred_check
          %p178 = pneg %p79
        $region34: #{tpu_custom_call.1} parent=27 // pred_check_branch
          %180 = sbr.rel (%p178) target = $region36
        $region35: #{tpu_custom_call.1} parent=27 // pred_region
          %181 = dma.done %s174, 2048
        $region36: #{tpu_custom_call.1} parent=27 // pred_fallthru
          _
        %p182 = pneg %p53
        %p183 = pneg %p50
        %s184 = sand.u32 %s66, 1
        %s185 = scalar_lea.sflag [#allocation6], %s184
        %s186 = sand.u32 %s66, 1
        %s187 = smul.addr %s186, 128
        %s188 = scalar_lea.vmem [#allocation5], %s187
        %p189 = pneg %p79
        %p190 = pneg %p76
        %p191 = pneg %p107
        %p192 = pneg %p104
        %s193 = sand.u32 %s94, 1
        %s194 = scalar_lea.sflag [#allocation4], %s193
        %s195 = sand.u32 %s94, 1
        %s196 = smul.addr %s195, 64
        %s197 = scalar_lea.vmem [#allocation7], %s196
        %s198 = smul.u32 8, %s24
        %s199 = smul.u32 8, %s24
        %v200 = vld [vmem:[#allocation2] sm:$0xff]
        %v201 = vld [vmem:[#allocation2 + $0x8] sm:$0xff]
        %v202 = vld [vmem:[#allocation2 + $0x10] sm:$0xff]
        %v203 = vld [vmem:[#allocation2 + $0x18] sm:$0xff]
        %v204 = vld [vmem:[#allocation2 + $0x20] sm:$0xff]
        %v205 = vld [vmem:[#allocation2 + $0x28] sm:$0xff]
        %v206 = vld [vmem:[#allocation2 + $0x30] sm:$0xff]
        %v207 = vld [vmem:[#allocation2 + $0x38] sm:$0xff]
        %v208 = vld [vmem:[%s177] sm:$0xff]
        %v209 = vld [vmem:[%s177 + $0x8] sm:$0xff]
        %v210 = vld [vmem:[%s177 + $0x10] sm:$0xff]
        %v211 = vld [vmem:[%s177 + $0x18] sm:$0xff]
        %v212 = vld [vmem:[%s177 + $0x20] sm:$0xff]
        %v213 = vld [vmem:[%s177 + $0x28] sm:$0xff]
        %v214 = vld [vmem:[%s177 + $0x30] sm:$0xff]
        %v215 = vld [vmem:[%s177 + $0x38] sm:$0xff]
        %v216 = vld [vmem:[%s177 + $0x40] sm:$0xff]
        %v217 = vld [vmem:[%s177 + $0x48] sm:$0xff]
        %v218 = vld [vmem:[%s177 + $0x50] sm:$0xff]
        %v219 = vld [vmem:[%s177 + $0x58] sm:$0xff]
        %v220 = vld [vmem:[%s177 + $0x60] sm:$0xff]
        %v221 = vld [vmem:[%s177 + $0x68] sm:$0xff]
        %v222 = vld [vmem:[%s177 + $0x70] sm:$0xff]
        %v223 = vld [vmem:[%s177 + $0x78] sm:$0xff]
        %224 = vmatprep.subr.mxu0 0.0
        %225 = vmatpush1.msra.mxu0 %v208
        %226 = vmatprep.subr.mxu0 0.0
        %227 = vmatpush1.msra.mxu0 %v209
        %228 = vmatprep.subr.mxu0 0.0
        %229 = vmatpush1.msra.mxu0 %v210
        %230 = vmatprep.subr.mxu0 0.0
        %231 = vmatpush1.msra.mxu0 %v211
        %232 = vmatprep.subr.mxu0 0.0
        %233 = vmatpush1.msra.mxu0 %v212
        %234 = vmatprep.subr.mxu0 0.0
        %235 = vmatpush1.msra.mxu0 %v213
        %236 = vmatprep.subr.mxu0 0.0
        %237 = vmatpush1.msra.mxu0 %v214
        %238 = vmatprep.subr.mxu0 0.0
        %239 = vmatpush1.msra.mxu0 %v215
        %240 = vmatprep.subr.mxu0 0.0
        %241 = vmatpush1.msra.mxu0 %v216
        %242 = vmatprep.subr.mxu0 0.0
        %243 = vmatpush1.msra.mxu0 %v217
        %244 = vmatprep.subr.mxu0 0.0
        %245 = vmatpush1.msra.mxu0 %v218
        %246 = vmatprep.subr.mxu0 0.0
        %247 = vmatpush1.msra.mxu0 %v219
        %248 = vmatprep.subr.mxu0 0.0
        %249 = vmatpush1.msra.mxu0 %v220
        %250 = vmatprep.subr.mxu0 0.0
        %251 = vmatpush1.msra.mxu0 %v221
        %252 = vmatprep.subr.mxu0 0.0
        %253 = vmatpush1.msra.mxu0 %v222
        %254 = vmatprep.subr.mxu0 0.0
        %255 = vmatpush1.msra.mxu0 %v223
        %256 = vmatprep.subr.mxu0 0.0
        %257 = vmatpush1.msra.mxu0 0.0
        %258 = vmatprep.subr.mxu0 0.0
        %259 = vmatpush1.msra.mxu0 0.0
        %260 = vmatprep.subr.mxu0 0.0
        %261 = vmatpush1.msra.mxu0 0.0
        %262 = vmatprep.subr.mxu0 0.0
        %263 = vmatpush1.msra.mxu0 0.0
        %264 = vmatprep.subr.mxu0 0.0
        %265 = vmatpush1.msra.mxu0 0.0
        %266 = vmatprep.subr.mxu0 0.0
        %267 = vmatpush1.msra.mxu0 0.0
        %268 = vmatprep.subr.mxu0 0.0
        %269 = vmatpush1.msra.mxu0 0.0
        %270 = vmatprep.subr.mxu0 0.0
        %271 = vmatpush1.msra.mxu0 0.0
        %272 = vmatprep.subr.mxu0 0.0
        %273 = vmatpush1.msra.mxu0 0.0
        %274 = vmatprep.subr.mxu0 0.0
        %275 = vmatpush1.msra.mxu0 0.0
        %276 = vmatprep.subr.mxu0 0.0
        %277 = vmatpush1.msra.mxu0 0.0
        %278 = vmatprep.subr.mxu0 0.0
        %279 = vmatpush1.msra.mxu0 0.0
        %280 = vmatprep.subr.mxu0 0.0
        %281 = vmatpush1.msra.mxu0 0.0
        %282 = vmatprep.subr.mxu0 0.0
        %283 = vmatpush1.msra.mxu0 0.0
        %284 = vmatprep.subr.mxu0 0.0
        %285 = vmatpush1.msra.mxu0 0.0
        %286 = vmatprep.subr.mxu0 0.0
        %287 = vmatpush1.msra.mxu0 0.0
        %288 = vmatprep.mubr.f32.mxu0 0.0
        %289 = vmatmul.mubr.f32.gmra.mrb[0].mxu0 %v200
        %v290 = vpop.f32.mrb[0].mxu0
        %v291 = vadd.f32 0.0, %v290
        %v292 = vpop.f32.mrb[0].mxu0
        %293 = vmatprep.mubr.f32.mxu0 0.0
        %294 = vmatmul.mubr.f32.gmra.mrb[0].mxu0 %v201
        %v295 = vpop.f32.mrb[0].mxu0
        %v296 = vadd.f32 0.0, %v295
        %v297 = vpop.f32.mrb[0].mxu0
        %298 = vmatprep.mubr.f32.mxu0 0.0
        %299 = vmatmul.mubr.f32.gmra.mrb[0].mxu0 %v202
        %v300 = vpop.f32.mrb[0].mxu0
        %v301 = vadd.f32 0.0, %v300
        %v302 = vpop.f32.mrb[0].mxu0
        %303 = vmatprep.mubr.f32.mxu0 0.0
        %304 = vmatmul.mubr.f32.gmra.mrb[0].mxu0 %v203
        %v305 = vpop.f32.mrb[0].mxu0
        %v306 = vadd.f32 0.0, %v305
        %v307 = vpop.f32.mrb[0].mxu0
        %308 = vmatprep.mubr.f32.mxu0 0.0
        %309 = vmatmul.mubr.f32.gmra.mrb[0].mxu0 %v204
        %v310 = vpop.f32.mrb[0].mxu0
        %v311 = vadd.f32 0.0, %v310
        %v312 = vpop.f32.mrb[0].mxu0
        %313 = vmatprep.mubr.f32.mxu0 0.0
        %314 = vmatmul.mubr.f32.gmra.mrb[0].mxu0 %v205
        %v315 = vpop.f32.mrb[0].mxu0
        %v316 = vadd.f32 0.0, %v315
        %v317 = vpop.f32.mrb[0].mxu0
        %318 = vmatprep.mubr.f32.mxu0 0.0
        %319 = vmatmul.mubr.f32.gmra.mrb[0].mxu0 %v206
        %v320 = vpop.f32.mrb[0].mxu0
        %v321 = vadd.f32 0.0, %v320
        %v322 = vpop.f32.mrb[0].mxu0
        %323 = vmatprep.mubr.f32.mxu0 0.0
        %324 = vmatmul.mubr.f32.gmra.mrb[0].mxu0 %v207
        %v325 = vpop.f32.mrb[0].mxu0
        %v326 = vadd.f32 0.0, %v325
        %v327 = vpop.f32.mrb[0].mxu0
        %328 = vdwg.mxu0
        %329 = vst [vmem:[%s197] sm:$0xff] %v291
        %330 = vst [vmem:[%s197 + $0x8] sm:$0xff] %v296
        %331 = vst [vmem:[%s197 + $0x10] sm:$0xff] %v301
        %332 = vst [vmem:[%s197 + $0x18] sm:$0xff] %v306
        %333 = vst [vmem:[%s197 + $0x20] sm:$0xff] %v311
        %334 = vst [vmem:[%s197 + $0x28] sm:$0xff] %v316
        %335 = vst [vmem:[%s197 + $0x30] sm:$0xff] %v321
        %336 = vst [vmem:[%s197 + $0x38] sm:$0xff] %v326
        %s337 = sand.u32 %s94, 1
        %s338 = scalar_lea.sflag [#allocation4], %s337
        %s339 = sand.u32 %s94, 1
        %s340 = smul.addr %s339, 64
        %s341 = scalar_lea.vmem [#allocation7], %s340
        // Predicated region
        $region37: #{tpu_custom_call.1} parent=27 // pred_check
          %p342 = pneg %p104
        $region38: #{tpu_custom_call.1} parent=27 // pred_check_branch
          %344 = sbr.rel (%p342) target = $region40
        $region39: #{tpu_custom_call.1} parent=27 // pred_region
          %s345 = smul.u32 8, %s24
          %s347 = ssub.s32 1024, 1024
          %348 = vsyncadd %s338, %s347
          %s349 = smul.addr %s345, 3
          %s350 = sadd.s32 %s25, %s349
          %s351 = smul.addr %s350, 128
          %s352 = scalar_lea.hbm %s2, %s351
          %s353 = sshll.u32 %s341, 4
          %s354 = int_to_ptr.vmem [resolvable:$true] %s353
          %359 = dma.vmem_to_hbm [thread:$0]  %s354, 1024, %s352, %s338, 128, 384, 8
        $region40: #{tpu_custom_call.1} parent=27 // pred_fallthru
          _
      $region28: #{tpu_custom_call.1} parent=5 // pred_fallthru
        _
      %p360 = scmp.le.s32.totalorder 2, %s15
      // Predicated region
      $region41: #{tpu_custom_call.1} parent=5 // pred_check
        %p361 = pneg %p360
      $region42: #{tpu_custom_call.1} parent=5 // pred_check_branch
        %363 = sbr.rel (%p361) target = $region44
      $region43: #{tpu_custom_call.1} parent=5 // pred_region
        %s364 = ssub.s32 %s15, 2
        // Predicated region
        $region45: #{tpu_custom_call.1} parent=43 // pred_check
          %p365 = pneg %p110
        $region46: #{tpu_custom_call.1} parent=43 // pred_check_branch
          %367 = sbr.rel (%p365) target = $region48
        $region47: #{tpu_custom_call.1} parent=43 // pred_region
          %s368 = sand.u32 %s95, 1
          %s369 = scalar_lea.sflag [#allocation4], %s368
          %s370 = sand.u32 %s95, 1
          %s371 = smul.addr %s370, 64
          %s372 = scalar_lea.vmem [#allocation7], %s371
          %373 = dma.done %s369, 1024
        $region48: #{tpu_custom_call.1} parent=43 // pred_fallthru
          _
      $region44: #{tpu_custom_call.1} parent=5 // pred_fallthru
        _
    $region6: #{tpu_custom_call.1} parent=1 // loop_footer
      %s19 = sadd.s32 1, %s15
    $region7: #{tpu_custom_call.1} parent=1 // loop_footer_branch
      %14 = sbr.rel target = $region3
    $region8: #{tpu_custom_call.1} parent=1 // loop_exit
      _
    %374 = vsyncpa [#allocation3], 1
    %s375 = scalar_lea.sflag [#allocation3], 1
    %376 = vsyncpa %s375, 1
    %377 = vsyncpa [#allocation6], 1
    %s378 = scalar_lea.sflag [#allocation6], 1
    %379 = vsyncpa %s378, 1
    %380 = vsyncpa [#allocation4], 1
    %s381 = scalar_lea.sflag [#allocation4], 1
    %382 = vsyncpa %s381, 1

</llo_original>
